<compile_context>
chip_gen: v7x
topology: tpu7x:2x2x1
jax: 0.10.0
libtpu: 0.0.40
codegen_flags: <defaults>
</compile_context>

<pallas_src>
import functools

import jax
import jax.numpy as jnp
from jax.experimental import pallas as pl
from jax.experimental.pallas import tpu as pltpu


def _round_up(v, m):
    return ((v + m - 1) // m) * m


# --------------------------------------------------------------------------
# Prologue: per-row (dim=1) numerically stable softmax of T_mat, run once.
# --------------------------------------------------------------------------
def _row_softmax_kernel(t_ref, w_ref):
    t = t_ref[...].astype(jnp.float32)
    t_max = jnp.max(t, axis=1, keepdims=True)
    e = jnp.exp(t - t_max)
    sm = e / jnp.sum(e, axis=1, keepdims=True)
    w_ref[...] = sm.astype(w_ref.dtype)


# --------------------------------------------------------------------------
# Main kernel, small/medium W: W fully VMEM-resident (constant block index),
# grid tiles only the flattened row dimension M.
# --------------------------------------------------------------------------
def _matmul_resident_w_kernel(x_ref, w_ref, o_ref):
    acc = jnp.dot(x_ref[...], w_ref[...], preferred_element_type=jnp.float32)
    o_ref[...] = acc.astype(o_ref.dtype)


# --------------------------------------------------------------------------
# Fallback for large W: tile the K (reduction) axis, f32 accumulator scratch.
# --------------------------------------------------------------------------
def _matmul_ktiled_kernel(x_ref, w_ref, o_ref, acc_ref):
    @pl.when(pl.program_id(1) == 0)
    def _():
        acc_ref[...] = jnp.zeros_like(acc_ref)

    acc_ref[...] += jnp.dot(x_ref[...], w_ref[...],
                            preferred_element_type=jnp.float32)

    @pl.when(pl.program_id(1) == pl.num_programs(1) - 1)
    def _():
        o_ref[...] = acc_ref[...].astype(o_ref.dtype)


@functools.partial(jax.jit, static_argnames=("block_m",))
def temp_softmax_weight(x, t_mat, *, block_m=4096):
    """Pallas TPU implementation of TempSoftmaxWeight.forward(x, T_mat).

    x     : (..., K)  arbitrary leading batch dims (flattened to rows)
    t_mat : (K, N)    mixing matrix; softmax taken over dim=1 (per row)
    """
    assert t_mat.ndim == 2, "T_mat must be 2-D (K, N)"
    K, N = t_mat.shape
    assert x.shape[-1] == K, (x.shape, t_mat.shape)

    batch_shape = x.shape[:-1]
    x2d = x.reshape(-1, K)
    M = x2d.shape[0]

    out_dtype = jnp.result_type(x.dtype, t_mat.dtype)
    # Emit the normalized weight in x's dtype so the matmul can take the
    # native (e.g. bf16) MXU path with f32 accumulation.
    w_dtype = x2d.dtype if jnp.issubdtype(x2d.dtype, jnp.floating) else jnp.float32

    # ---- generation-aware VMEM budget & x-tile byte target ---------------
    try:
        vmem_cap = pltpu.get_tpu_info().vmem_capacity_bytes
    except Exception:  # unknown backend / interpret mode
        vmem_cap = None
    if vmem_cap is not None and vmem_cap >= 96 * 1024 * 1024:
        vmem_limit = 64 * 1024 * 1024      # v5e / v6e: 128 MiB physical VMEM
        x_tile_bytes = 4 << 20
    else:
        vmem_limit = 32 * 1024 * 1024      # v7x (64 MiB VMEM) or unknown
        x_tile_bytes = 1 << 20

    # ---- 1) softmax(T_mat, dim=1), computed exactly once -----------------
    tk_rows = K if K <= 4096 else 4096     # multiple of 8 or full K
    w = pl.pallas_call(
        _row_softmax_kernel,
        out_shape=jax.ShapeDtypeStruct((K, N), w_dtype),
        grid_spec=pltpu.PrefetchScalarGridSpec(
            num_scalar_prefetch=0,
            grid=(pl.cdiv(K, tk_rows),),
            in_specs=[pl.BlockSpec((tk_rows, N), lambda i: (i, 0))],
            out_specs=pl.BlockSpec((tk_rows, N), lambda i: (i, 0)),
        ),
        compiler_params=pltpu.CompilerParams(
            dimension_semantics=("parallel",)),
    )(t_mat)

    # ---- 2) tiled matmul x @ w --------------------------------------------
    xbytes = x2d.dtype.itemsize
    wbytes = jnp.dtype(w_dtype).itemsize
    obytes = jnp.dtype(out_dtype).itemsize

    rows = max(8, x_tile_bytes // max(K * xbytes, 1))
    rows = max(8, (rows // 8) * 8)
    rows = min(rows, block_m)
    tm = M if M <= rows else rows
    # v7x megacore: guarantee >= 2 grid steps for non-trivial M so both
    # TensorCores get work (one extra ~0.35us step elsewhere is negligible).
    if M > 16:
        tm = min(tm, _round_up(pl.cdiv(M, 2), 8))

    # Resident-W VMEM footprint (double-buffered x / W / out tiles).
    resident_w_vmem = 2 * (tm * K * xbytes + K * N * wbytes + tm * N * obytes)
    use_resident = resident_w_vmem <= (vmem_limit * 3) // 4

    if use_resident:
        out2d = pl.pallas_call(
            _matmul_resident_w_kernel,
            out_shape=jax.ShapeDtypeStruct((M, N), out_dtype),
            grid_spec=pltpu.PrefetchScalarGridSpec(
                num_scalar_prefetch=0,
                grid=(pl.cdiv(M, tm),),
                in_specs=[
                    pl.BlockSpec((tm, K), lambda i: (i, 0)),
                    pl.BlockSpec((K, N), lambda i: (0, 0)),  # resident W
                ],
                out_specs=pl.BlockSpec((tm, N), lambda i: (i, 0)),
            ),
            compiler_params=pltpu.CompilerParams(
                dimension_semantics=("parallel",),
                vmem_limit_bytes=vmem_limit,
            ),
        )(x2d, w)
    else:
        # Large W: tile the reduction axis K.  tk must be a multiple of 128
        # that divides K (ragged reduction tiles would accumulate garbage).
        tk = K
        for cand in (2048, 1024, 512, 256, 128):
            if K % cand == 0:
                tk = cand
                break
        # TODO(synk): if K is huge and not a multiple of 128 we fall back to
        # full-K blocks, which may still exceed the VMEM budget.
        tm_k = max(8, ((x_tile_bytes // max(tk * xbytes, 1)) // 8) * 8)
        tm_k = min(tm_k, tm)
        if M <= tm_k:
            tm_k = M
        out2d = pl.pallas_call(
            _matmul_ktiled_kernel,
            out_shape=jax.ShapeDtypeStruct((M, N), out_dtype),
            grid_spec=pltpu.PrefetchScalarGridSpec(
                num_scalar_prefetch=0,
                grid=(pl.cdiv(M, tm_k), pl.cdiv(K, tk)),
                in_specs=[
                    pl.BlockSpec((tm_k, tk), lambda i, k: (i, k)),
                    pl.BlockSpec((tk, N), lambda i, k: (k, 0)),
                ],
                out_specs=pl.BlockSpec((tm_k, N), lambda i, k: (i, 0)),
                scratch_shapes=[pltpu.VMEM((tm_k, N), jnp.float32)],
            ),
            compiler_params=pltpu.CompilerParams(
                dimension_semantics=("parallel", "arbitrary"),
                vmem_limit_bytes=vmem_limit,
            ),
        )(x2d, w)

    return out2d.reshape(*batch_shape, N)


if __name__ == "__main__":
    key = jax.random.PRNGKey(0)
    k_x, k_t = jax.random.split(key)

    # Small shapes consistent with the module: batch=2, seq=8, hidden=32,
    # mixing matrix (32, 32).
    x = jax.random.normal(k_x, (2, 8, 32), dtype=jnp.float32)
    t_mat = jax.random.normal(k_t, (32, 32), dtype=jnp.float32)

    out = temp_softmax_weight(x, t_mat)
    jax.block_until_ready(out)

    # Pure-JAX reference (same semantics as the PyTorch module).
    ref = jnp.matmul(x, jax.nn.softmax(t_mat, axis=1))
    assert out.shape == ref.shape, (out.shape, ref.shape)
    assert jnp.allclose(out, ref, rtol=1e-5, atol=1e-5), float(
        jnp.max(jnp.abs(out - ref)))

    print("KERNEL_OK")
</pallas_src>

<mosaic_0001>
module attributes {stable_mosaic.version = 11 : i64} {
  func.func @_matmul_resident_w_kernel(%arg0: i32, %arg1: memref<16x32xf32, #tpu.memory_space<vmem>>, %arg2: memref<32x32xf32, #tpu.memory_space<vmem>>, %arg3: memref<16x32xf32, #tpu.memory_space<vmem>>) attributes {dimension_semantics = [#tpu.dimension_semantics<parallel>], iteration_bounds = array<i64: 1>, scalar_prefetch = 0 : i64, scratch_operands = 0 : i64, tpu.core_type = #tpu.core_type<tc>, window_params = [{transform_indices = @transform_0, window_bounds = array<i64: 16, 32>}, {pipeline_mode = #tpu.pipeline_mode<synchronous>, transform_indices = @transform_1, window_bounds = array<i64: 32, 32>}, {transform_indices = @transform_2, window_bounds = array<i64: 16, 32>}]} {
    %c0 = arith.constant 0 : index
    %c0_0 = arith.constant 0 : index
    %0 = vector.load %arg1[%c0, %c0_0] : memref<16x32xf32, #tpu.memory_space<vmem>>, vector<16x32xf32>
    %c0_1 = arith.constant 0 : index
    %c0_2 = arith.constant 0 : index
    %1 = vector.load %arg2[%c0_1, %c0_2] : memref<32x32xf32, #tpu.memory_space<vmem>>, vector<32x32xf32>
    %cst = arith.constant dense<0.000000e+00> : vector<16x32xf32>
    %2 = tpu.matmul %0, %1, %cst {dimension_numbers = #tpu.dot_dimension_numbers<[1], [0], [0], [1], [0, 0, 1, 1], [], []>} : vector<16x32xf32>, vector<32x32xf32>, vector<16x32xf32> -> vector<16x32xf32>
    %c0_3 = arith.constant 0 : index
    %c0_4 = arith.constant 0 : index
    %3 = vector.load %arg3[%c0_3, %c0_4] : memref<16x32xf32, #tpu.memory_space<vmem>>, vector<16x32xf32>
    tpu.vector_store %arg3[%c0_3, %c0_4], %2 {strides = array<i32>} : memref<16x32xf32, #tpu.memory_space<vmem>>, vector<16x32xf32>,
    return
  }
  func.func @transform_0(%arg0: i32) -> (i32, i32) {
    %c0_i32 = arith.constant 0 : i32
    %c0_i32_0 = arith.constant 0 : i32
    return %arg0, %c0_i32 : i32, i32
  }
  func.func @transform_1(%arg0: i32) -> (i32, i32) {
    %c0_i32 = arith.constant 0 : i32
    %c0_i32_0 = arith.constant 0 : i32
    %c0_i32_1 = arith.constant 0 : i32
    return %c0_i32, %c0_i32_0 : i32, i32
  }
  func.func @transform_2(%arg0: i32) -> (i32, i32) {
    %c0_i32 = arith.constant 0 : i32
    %c0_i32_0 = arith.constant 0 : i32
    return %arg0, %c0_i32 : i32, i32
  }
}

module attributes {stable_mosaic.version = 11 : i64} {
  func.func @_row_softmax_kernel(%arg0: i32, %arg1: memref<32x32xf32, #tpu.memory_space<vmem>>, %arg2: memref<32x32xf32, #tpu.memory_space<vmem>>) attributes {dimension_semantics = [#tpu.dimension_semantics<parallel>], iteration_bounds = array<i64: 1>, scalar_prefetch = 0 : i64, scratch_operands = 0 : i64, tpu.core_type = #tpu.core_type<tc>, window_params = [{transform_indices = @transform_0, window_bounds = array<i64: 32, 32>}, {transform_indices = @transform_1, window_bounds = array<i64: 32, 32>}]} {
    %c0 = arith.constant 0 : index
    %c0_0 = arith.constant 0 : index
    %0 = vector.load %arg1[%c0, %c0_0] : memref<32x32xf32, #tpu.memory_space<vmem>>, vector<32x32xf32>
    %cst = arith.constant dense<0xFF800000> : vector<32xf32>
    %1 = vector.multi_reduction <maximumf>, %0, %cst [1] : vector<32x32xf32> to vector<32xf32>
    %2 = vector.shape_cast %1 : vector<32xf32> to vector<32x1xf32>
    %3 = vector.broadcast %2 : vector<32x1xf32> to vector<32x32xf32>
    %4 = arith.subf %0, %3 : vector<32x32xf32>
    %5 = math.exp %4 : vector<32x32xf32>
    %cst_1 = arith.constant dense<0.000000e+00> : vector<32xf32>
    %6 = vector.multi_reduction <add>, %5, %cst_1 [1] : vector<32x32xf32> to vector<32xf32>
    %7 = vector.shape_cast %6 : vector<32xf32> to vector<32x1xf32>
    %8 = vector.broadcast %7 : vector<32x1xf32> to vector<32x32xf32>
    %9 = arith.divf %5, %8 : vector<32x32xf32>
    %c0_2 = arith.constant 0 : index
    %c0_3 = arith.constant 0 : index
    %10 = vector.load %arg2[%c0_2, %c0_3] : memref<32x32xf32, #tpu.memory_space<vmem>>, vector<32x32xf32>
    tpu.vector_store %arg2[%c0_2, %c0_3], %9 {strides = array<i32>} : memref<32x32xf32, #tpu.memory_space<vmem>>, vector<32x32xf32>,
    return
  }
  func.func @transform_0(%arg0: i32) -> (i32, i32) {
    %c0_i32 = arith.constant 0 : i32
    %c0_i32_0 = arith.constant 0 : i32
    return %arg0, %c0_i32 : i32, i32
  }
  func.func @transform_1(%arg0: i32) -> (i32, i32) {
    %c0_i32 = arith.constant 0 : i32
    %c0_i32_0 = arith.constant 0 : i32
    return %arg0, %c0_i32 : i32, i32
  }
}

</mosaic_0001>

<llo_original>
// kernel: temp_softmax_weight.2
$region0: #{temp_softmax_weight.2}
  #allocation0 [shape = 'u32[]', space=smem, size = 0x4, offset = 0x4, fixed_abs, tag = 'smem constant byte address 0x4 - core index']
  #allocation1 [shape = 'u32[144,128]{1,0:T(1,128)}', space=vmem, size = 0x12000, scoped, tag = 'internal scratch']
  %s0 = inlined_call_operand.hbm [shape: f32[32,32], index: 0, kind: input, shape index: {}]
  %s1 = inlined_call_operand.vmem [shape: f32[32,32], index: 1, kind: output, shape index: {}]
  %s2 = sld [smem:[#allocation0]]
  $region18: #{temp_softmax_weight.2} parent=0
    _
  %s4 = ssub.s32 1, %s2
  %s5 = scalar_select 0, %s4, %s2
  $region1: #{temp_softmax_weight.2} parent=0
    #allocation2 [shape = 'u8[16384]{0}', space=vmem, size = 0x4000, scoped, tag = 'input window, operand 0, single buffered']
    #allocation3 [shape = 's32[1]{0}', space=sflag, size = 0x4, scoped, tag = 'scoped memory for temp_softmax_weight.2']
    %6 = vsyncpa [#allocation3], 0
    // Predicated region
    $region2: #{temp_softmax_weight.2} parent=1 // pred_check
      _
    $region3: #{temp_softmax_weight.2} parent=1 // pred_check_branch
      %8 = sbr.rel (0) target = $region5
    $region4: #{temp_softmax_weight.2} parent=1 // pred_region
      %s10 = ssub.s32 512, 512
      %11 = vsyncadd [#allocation3], %s10
      %s12 = sshll.u32 [#allocation2], 4
      %s13 = int_to_ptr.vmem [resolvable:$true] %s12
      %18 = dma.hbm_to_vmem [thread:$0]  %s0, 512, %s13, [#allocation3], 128, 128, 8
    $region5: #{temp_softmax_weight.2} parent=1 // pred_fallthru
      _
    // Predicated region
    $region6: #{temp_softmax_weight.2} parent=1 // pred_check
      _
    $region7: #{temp_softmax_weight.2} parent=1 // pred_check_branch
      %20 = sbr.rel (0) target = $region9
    $region8: #{temp_softmax_weight.2} parent=1 // pred_region
      %21 = dma.done [#allocation3], 512
    $region9: #{temp_softmax_weight.2} parent=1 // pred_fallthru
      _
    %v22 = vld [vmem:[#allocation2] sm:$0xff]
    %v23 = vld [vmem:[#allocation2 + $0x8] sm:$0xff]
    %v24 = vld [vmem:[#allocation2 + $0x10] sm:$0xff]
    %v25 = vld [vmem:[#allocation2 + $0x18] sm:$0xff]
    %vm26 = vcmask 261120
    %v27 = vsel %vm26, %v22, -inf
    %28 = vmax.xlane.f32.xlu0 %v27
    %v29 = vpop.xlane.xlu0 %28
    %v30 = vsel %vm26, %v23, -inf
    %31 = vmax.xlane.f32.xlu0 %v30
    %v32 = vpop.xlane.xlu0 %31
    %v33 = vsel %vm26, %v24, -inf
    %34 = vmax.xlane.f32.xlu0 %v33
    %v35 = vpop.xlane.xlu0 %34
    %v36 = vsel %vm26, %v25, -inf
    %37 = vmax.xlane.f32.xlu0 %v36
    %v38 = vpop.xlane.xlu0 %37
    %v39 = vsub.f32 %v22, %v29
    %v40 = vsub.f32 %v23, %v32
    %v41 = vsub.f32 %v24, %v35
    %v42 = vsub.f32 %v25, %v38
    %v43 = vmul.f32 %v39, 1.442695
    %v44 = vpow.pop %v43
    %v45 = vmul.f32 %v40, 1.442695
    %v46 = vpow.pop %v45
    %v47 = vmul.f32 %v41, 1.442695
    %v48 = vpow.pop %v47
    %v49 = vmul.f32 %v42, 1.442695
    %v50 = vpow.pop %v49
    %v51 = vsel %vm26, %v44, 0.0
    %52 = vadd.xlane.f32.xlu0 %v51
    %v53 = vpop.xlane.xlu0 %52
    %v54 = vsel %vm26, %v46, 0.0
    %55 = vadd.xlane.f32.xlu0 %v54
    %v56 = vpop.xlane.xlu0 %55
    %v57 = vsel %vm26, %v48, 0.0
    %58 = vadd.xlane.f32.xlu0 %v57
    %v59 = vpop.xlane.xlu0 %58
    %v60 = vsel %vm26, %v50, 0.0
    %61 = vadd.xlane.f32.xlu0 %v60
    %v62 = vpop.xlane.xlu0 %61
    %v63 = vrcp.pop %v53
    %v64 = vmul.f32 %v44, %v63
    %v65 = vrcp.pop %v56
    %v66 = vmul.f32 %v46, %v65
    %v67 = vrcp.pop %v59
    %v68 = vmul.f32 %v48, %v67
    %v69 = vrcp.pop %v62
    %v70 = vmul.f32 %v50, %v69
    %71 = vst.msk [vmem:[%s1] sm:$0xff] %vm26, %v64
    %72 = vst.msk [vmem:[%s1 + $0x8] sm:$0xff] %vm26, %v66
    %73 = vst.msk [vmem:[%s1 + $0x10] sm:$0xff] %vm26, %v68
    %74 = vst.msk [vmem:[%s1 + $0x18] sm:$0xff] %vm26, %v70
    // Predicated region
    $region10: #{temp_softmax_weight.2} parent=1 // pred_check
      _
    $region11: #{temp_softmax_weight.2} parent=1 // pred_check_branch
      %76 = sbr.rel (0) target = $region13
    $region12: #{temp_softmax_weight.2} parent=1 // pred_region
      _
    $region13: #{temp_softmax_weight.2} parent=1 // pred_fallthru
      _
    // Predicated region
    $region14: #{temp_softmax_weight.2} parent=1 // pred_check
      _
    $region15: #{temp_softmax_weight.2} parent=1 // pred_check_branch
      %78 = sbr.rel (0) target = $region17
    $region16: #{temp_softmax_weight.2} parent=1 // pred_region
      _
    $region17: #{temp_softmax_weight.2} parent=1 // pred_fallthru
      _
    %79 = vsyncpa [#allocation3], 1

// kernel: temp_softmax_weight.3
$region0: #{temp_softmax_weight.3}
  #allocation0 [shape = 'u32[]', space=smem, size = 0x4, offset = 0x4, fixed_abs, tag = 'smem constant byte address 0x4 - core index']
  #allocation1 [shape = 'u32[144,128]{1,0:T(1,128)}', space=vmem, size = 0x12000, scoped, tag = 'internal scratch']
  %s0 = inlined_call_operand.vmem [shape: f32[16,32], index: 0, kind: input, shape index: {}]
  %s1 = inlined_call_operand.vmem [shape: f32[32,32], index: 1, kind: input, shape index: {}]
  %s2 = inlined_call_operand.hbm [shape: f32[16,32], index: 2, kind: output, shape index: {}]
  %s3 = sld [smem:[#allocation0]]
  $region18: #{temp_softmax_weight.3} parent=0
    _
  %s5 = ssub.s32 1, %s3
  %s6 = scalar_select 0, %s5, %s3
  $region1: #{temp_softmax_weight.3} parent=0
    #allocation2 [shape = 'u8[8192]{0}', space=vmem, size = 0x2000, scoped, tag = 'output window, operand 0, single buffered']
    #allocation3 [shape = 's32[1]{0}', space=sflag, size = 0x4, scoped, tag = 'scoped memory for temp_softmax_weight.3']
    %7 = vsyncpa [#allocation3], 0
    // Predicated region
    $region2: #{temp_softmax_weight.3} parent=1 // pred_check
      _
    $region3: #{temp_softmax_weight.3} parent=1 // pred_check_branch
      %9 = sbr.rel (0) target = $region5
    $region4: #{temp_softmax_weight.3} parent=1 // pred_region
      _
    $region5: #{temp_softmax_weight.3} parent=1 // pred_fallthru
      _
    // Predicated region
    $region6: #{temp_softmax_weight.3} parent=1 // pred_check
      _
    $region7: #{temp_softmax_weight.3} parent=1 // pred_check_branch
      %11 = sbr.rel (0) target = $region9
    $region8: #{temp_softmax_weight.3} parent=1 // pred_region
      _
    $region9: #{temp_softmax_weight.3} parent=1 // pred_fallthru
      _
    %v12 = vld [vmem:[%s0] sm:$0xff]
    %v13 = vld [vmem:[%s0 + $0x8] sm:$0xff]
    %v14 = vld [vmem:[%s1] sm:$0xff]
    %v15 = vld [vmem:[%s1 + $0x8] sm:$0xff]
    %v16 = vld [vmem:[%s1 + $0x10] sm:$0xff]
    %v17 = vld [vmem:[%s1 + $0x18] sm:$0xff]
    %vm18 = vcmask 261120
    %v20 = vsel %vm18, %v12, 0
    %v23 = vsel %vm18, %v13, 0
    %25 = vmatprep.subr.mxu0 0.0
    %26 = vmatpush1.msra.mxu0 %v14
    %27 = vmatprep.subr.mxu0 0.0
    %28 = vmatpush1.msra.mxu0 %v15
    %29 = vmatprep.subr.mxu0 0.0
    %30 = vmatpush1.msra.mxu0 %v16
    %31 = vmatprep.subr.mxu0 0.0
    %32 = vmatpush1.msra.mxu0 %v17
    %33 = vmatprep.subr.mxu0 0.0
    %34 = vmatpush1.msra.mxu0 0.0
    %35 = vmatprep.subr.mxu0 0.0
    %36 = vmatpush1.msra.mxu0 0.0
    %37 = vmatprep.subr.mxu0 0.0
    %38 = vmatpush1.msra.mxu0 0.0
    %39 = vmatprep.subr.mxu0 0.0
    %40 = vmatpush1.msra.mxu0 0.0
    %41 = vmatprep.subr.mxu0 0.0
    %42 = vmatpush1.msra.mxu0 0.0
    %43 = vmatprep.subr.mxu0 0.0
    %44 = vmatpush1.msra.mxu0 0.0
    %45 = vmatprep.subr.mxu0 0.0
    %46 = vmatpush1.msra.mxu0 0.0
    %47 = vmatprep.subr.mxu0 0.0
    %48 = vmatpush1.msra.mxu0 0.0
    %49 = vmatprep.subr.mxu0 0.0
    %50 = vmatpush1.msra.mxu0 0.0
    %51 = vmatprep.subr.mxu0 0.0
    %52 = vmatpush1.msra.mxu0 0.0
    %53 = vmatprep.subr.mxu0 0.0
    %54 = vmatpush1.msra.mxu0 0.0
    %55 = vmatprep.subr.mxu0 0.0
    %56 = vmatpush1.msra.mxu0 0.0
    %57 = vmatprep.subr.mxu0 0.0
    %58 = vmatpush1.msra.mxu0 0.0
    %59 = vmatprep.subr.mxu0 0.0
    %60 = vmatpush1.msra.mxu0 0.0
    %61 = vmatprep.subr.mxu0 0.0
    %62 = vmatpush1.msra.mxu0 0.0
    %63 = vmatprep.subr.mxu0 0.0
    %64 = vmatpush1.msra.mxu0 0.0
    %65 = vmatprep.subr.mxu0 0.0
    %66 = vmatpush1.msra.mxu0 0.0
    %67 = vmatprep.subr.mxu0 0.0
    %68 = vmatpush1.msra.mxu0 0.0
    %69 = vmatprep.subr.mxu0 0.0
    %70 = vmatpush1.msra.mxu0 0.0
    %71 = vmatprep.subr.mxu0 0.0
    %72 = vmatpush1.msra.mxu0 0.0
    %73 = vmatprep.subr.mxu0 0.0
    %74 = vmatpush1.msra.mxu0 0.0
    %75 = vmatprep.subr.mxu0 0.0
    %76 = vmatpush1.msra.mxu0 0.0
    %77 = vmatprep.subr.mxu0 0.0
    %78 = vmatpush1.msra.mxu0 0.0
    %79 = vmatprep.subr.mxu0 0.0
    %80 = vmatpush1.msra.mxu0 0.0
    %81 = vmatprep.subr.mxu0 0.0
    %82 = vmatpush1.msra.mxu0 0.0
    %83 = vmatprep.subr.mxu0 0.0
    %84 = vmatpush1.msra.mxu0 0.0
    %85 = vmatprep.subr.mxu0 0.0
    %86 = vmatpush1.msra.mxu0 0.0
    %87 = vmatprep.subr.mxu0 0.0
    %88 = vmatpush1.msra.mxu0 0.0
    %89 = vmatprep.mubr.f32.mxu0 0.0
    %90 = vmatmul.mubr.f32.gmra.mrb[0].mxu0 %v20
    %v91 = vpop.f32.mrb[0].mxu0
    %v92 = vadd.f32 0.0, %v91
    %v93 = vpop.f32.mrb[0].mxu0
    %94 = vmatprep.mubr.f32.mxu0 0.0
    %95 = vmatmul.mubr.f32.gmra.mrb[0].mxu0 %v23
    %v96 = vpop.f32.mrb[0].mxu0
    %v97 = vadd.f32 0.0, %v96
    %v98 = vpop.f32.mrb[0].mxu0
    %99 = vdwg.mxu0
    %100 = vst.msk [vmem:[#allocation2] sm:$0xff] %vm18, %v92
    %101 = vst.msk [vmem:[#allocation2 + $0x8] sm:$0xff] %vm18, %v97
    // Predicated region
    $region10: #{temp_softmax_weight.3} parent=1 // pred_check
      _
    $region11: #{temp_softmax_weight.3} parent=1 // pred_check_branch
      %103 = sbr.rel (0) target = $region13
    $region12: #{temp_softmax_weight.3} parent=1 // pred_region
      %s105 = ssub.s32 256, 256
      %106 = vsyncadd [#allocation3], %s105
      %s107 = sshll.u32 [#allocation2], 4
      %s108 = int_to_ptr.vmem [resolvable:$true] %s107
      %113 = dma.vmem_to_hbm [thread:$0]  %s108, 256, %s2, [#allocation3], 128, 128, 8
    $region13: #{temp_softmax_weight.3} parent=1 // pred_fallthru
      _
    // Predicated region
    $region14: #{temp_softmax_weight.3} parent=1 // pred_check
      _
    $region15: #{temp_softmax_weight.3} parent=1 // pred_check_branch
      %115 = sbr.rel (0) target = $region17
    $region16: #{temp_softmax_weight.3} parent=1 // pred_region
      %116 = dma.done [#allocation3], 256
    $region17: #{temp_softmax_weight.3} parent=1 // pred_fallthru
      _
    %117 = vsyncpa [#allocation3], 1

</llo_original>
